<compile_context>
chip_gen: v6e
topology: v6e:2x2x1
jax: 0.10.0
libtpu: 0.0.40
codegen_flags: <defaults>
</compile_context>

<pallas_src>
import math

import jax
import jax.numpy as jnp
from jax.experimental import pallas as pl
from jax.experimental.pallas import tpu as pltpu


# ---------------------------------------------------------------------------
# Packed-parameter layout (host side).  Each segment starts on a sublane
# (multiple-of-8) row boundary; lane width is the full 128-lane vreg.
# fc1's weight and fc2's action-half are zero-extended to (S+A) rows so the
# kernel can matmul the fused [x | a] tile directly with no in-kernel slicing.
# ---------------------------------------------------------------------------
_LANES = 128


def _round_up(n, m):
    return ((n + m - 1) // m) * m


def make_packed_layout(state_size, action_size, h1, h2):
    feat = state_size + action_size
    off = {}
    row = 0
    off["W1"] = row    # (feat, h1)  fc1.weight^T, action rows zero
    row = _round_up(row + feat, 8)
    off["b1"] = row    # (1, h1)
    row = _round_up(row + 1, 8)
    off["W2h"] = row   # (h1, h2)    fc2.weight^T, rows for the h1 part
    row = _round_up(row + h1, 8)
    off["W2a"] = row   # (feat, h2)  fc2.weight^T action part, state rows zero
    row = _round_up(row + feat, 8)
    off["b2"] = row    # (1, h2)
    row = _round_up(row + 1, 8)
    off["W3"] = row    # (1, h2)     fc3.weight (row vector)
    row = _round_up(row + 1, 8)
    return off, row, _LANES


def pack_critic_params(p, state_size, action_size, h1, h2):
    """Pack PyTorch-layout params into one (rows, 128) f32 buffer + SMEM scalar."""
    S, A = state_size, action_size
    off, nrows, lanes = make_packed_layout(S, A, h1, h2)
    buf = jnp.zeros((nrows, lanes), jnp.float32)
    W1t = p["W1"].T          # (S, h1)
    W2t = p["W2"].T          # (h1 + A, h2)
    # fc1 weight occupies the state rows of the fused input; action rows stay 0.
    buf = buf.at[off["W1"]:off["W1"] + S, :h1].set(W1t)
    buf = buf.at[off["b1"]:off["b1"] + 1, :h1].set(p["b1"][None, :])
    buf = buf.at[off["W2h"]:off["W2h"] + h1, :h2].set(W2t[:h1])
    # fc2 action-half occupies the action rows of the fused input; state rows 0.
    buf = buf.at[off["W2a"] + S:off["W2a"] + S + A, :h2].set(W2t[h1:])
    buf = buf.at[off["b2"]:off["b2"] + 1, :h2].set(p["b2"][None, :])
    buf = buf.at[off["W3"]:off["W3"] + 1, :h2].set(p["W3"])
    b3 = p["b3"].astype(jnp.float32).reshape((1,))
    return buf, b3


# ---------------------------------------------------------------------------
# Pallas forward
# ---------------------------------------------------------------------------
def critic_forward(x, a, packed_params, b3, *, state_size, action_size,
                   h1=8, h2=16, block_b=4096):
    """x: (B, state_size) f32, a: (B, action_size) f32  ->  (B, 1) f32."""
    B = x.shape[0]
    S, A = state_size, action_size
    feat = S + A
    off, nrows, lanes = make_packed_layout(S, A, h1, h2)

    # Batch tile: big (amortize ~0.35us/step), but at least 2 tiles whenever
    # the batch allows it so v7x's second TensorCore gets work.
    TB = max(8, min(block_b, _round_up(pl.cdiv(B, 2), 8)))
    num_tiles = pl.cdiv(B, TB)
    B_pad = num_tiles * TB

    # Fuse x and a into one lane-padded activation stream; pad the batch to a
    # multiple of TB so every grid tile is full (padded rows discarded below).
    xa = jnp.concatenate([x.astype(jnp.float32), a.astype(jnp.float32)], axis=1)
    if B_pad != B:
        xa = jnp.pad(xa, ((0, B_pad - B), (0, 0)))

    def kernel(params_ref, b3_ref, xa_ref, out_ref):
        xav = xa_ref[...]                                               # (TB, S+A)

        # Static slices into the resident packed-parameter block (no per-step DMA).
        w1 = params_ref[off["W1"]:off["W1"] + feat, 0:h1]               # (S+A, H1)
        b1 = params_ref[off["b1"]:off["b1"] + 1, 0:h1]                  # (1, H1)
        w2h = params_ref[off["W2h"]:off["W2h"] + h1, 0:h2]              # (H1, H2)
        w2a = params_ref[off["W2a"]:off["W2a"] + feat, 0:h2]            # (S+A, H2)
        b2 = params_ref[off["b2"]:off["b2"] + 1, 0:h2]                  # (1, H2)
        w3 = params_ref[off["W3"]:off["W3"] + 1, 0:h2]                  # (1, H2)

        # fc1 + ReLU (MXU).  w1's action rows are zero, so [x|a] @ w1 == x @ W1^T.
        h1v = jnp.maximum(
            jnp.dot(xav, w1, preferred_element_type=jnp.float32) + b1, 0.0)
        # fc2 on cat([h1, a]) + ReLU, exact split matmul (MXU).  w2a's state
        # rows are zero, so [x|a] @ w2a == a @ W2[:, h1:]^T.
        h2v = jnp.maximum(
            jnp.dot(h1v, w2h, preferred_element_type=jnp.float32)
            + jnp.dot(xav, w2a, preferred_element_type=jnp.float32) + b2, 0.0)
        # fc3 emitted directly in lane-dense (1, TB) orientation via a
        # transposed-RHS contraction (same pattern as attention scores);
        # bias comes in as an SMEM scalar.
        q_row = jnp.einsum('ih,bh->ib', w3, h2v,
                           preferred_element_type=jnp.float32)          # (1, TB)
        out_ref[...] = q_row + b3_ref[0]

    out = pl.pallas_call(
        kernel,
        # Lane-dense output: one (1, TB) row per tile; reshaped to (B,1) below.
        out_shape=jax.ShapeDtypeStruct((num_tiles, TB), jnp.float32),
        grid=(num_tiles,),
        in_specs=[
            # Packed params: constant block index -> DMA'd once, VMEM-resident.
            pl.BlockSpec((nrows, lanes), lambda i: (0, 0)),
            # fc3 bias: single f32 scalar in SMEM (no padded VMEM tile / DMA).
            pl.BlockSpec(memory_space=pltpu.MemorySpace.SMEM),
            # Fused activations: tiled over the batch grid, auto double-buffered.
            pl.BlockSpec((TB, feat), lambda i: (i, 0)),
        ],
        out_specs=pl.BlockSpec((1, TB), lambda i: (i, 0)),
        compiler_params=pltpu.CompilerParams(
            dimension_semantics=("parallel",),       # v7x: tiles across 2 TCs
            vmem_limit_bytes=32 * 1024 * 1024),      # headroom for big TB, safe
    )(packed_params, b3, xa)

    # (num_tiles, TB) row-major == batch order; drop padded rows.
    return out.reshape(B_pad, 1)[:B]


# ---------------------------------------------------------------------------
# Parameter init mirroring the PyTorch Critic:
#   fc1/fc2 weights: fan-in uniform; fc3 weight: U(-init_w, init_w);
#   all biases keep PyTorch nn.Linear default U(-1/sqrt(fan_in), +1/sqrt(fan_in)).
# ---------------------------------------------------------------------------
def init_critic_params(key, state_size, action_size, h1=8, h2=16, init_w=0.003):
    ks = jax.random.split(key, 6)

    def unif(k, shape, lim):
        return jax.random.uniform(k, shape, jnp.float32, -lim, lim)

    lim1 = 1.0 / math.sqrt(state_size)
    lim2 = 1.0 / math.sqrt(h1 + action_size)
    lim3 = 1.0 / math.sqrt(h2)
    return dict(
        W1=unif(ks[0], (h1, state_size), lim1),
        b1=unif(ks[1], (h1,), lim1),
        W2=unif(ks[2], (h2, h1 + action_size), lim2),
        b2=unif(ks[3], (h2,), lim2),
        W3=unif(ks[4], (1, h2), init_w),
        b3=unif(ks[5], (1,), lim3),
    )


# ---------------------------------------------------------------------------
# Pure-JAX reference (direct transcription of the PyTorch forward)
# ---------------------------------------------------------------------------
def critic_ref(x, a, p):
    h1v = jnp.maximum(x @ p["W1"].T + p["b1"], 0.0)
    cat = jnp.concatenate([h1v, a], axis=1)
    h2v = jnp.maximum(cat @ p["W2"].T + p["b2"], 0.0)
    return h2v @ p["W3"].T + p["b3"]


if __name__ == "__main__":
    state_size, action_size = 12, 6
    h1, h2 = 8, 16

    key = jax.random.PRNGKey(0)
    kx, ka, kp = jax.random.split(key, 3)
    params = init_critic_params(kp, state_size, action_size, h1, h2)
    packed, b3 = pack_critic_params(params, state_size, action_size, h1, h2)

    # --- primary small-shape check (B=8, single tile) ---
    x = jax.random.normal(kx, (8, state_size), jnp.float32)
    a = jax.random.normal(ka, (8, action_size), jnp.float32)
    out = critic_forward(x, a, packed, b3,
                         state_size=state_size, action_size=action_size,
                         h1=h1, h2=h2)
    jax.block_until_ready(out)
    ref = critic_ref(x, a, params)
    assert out.shape == (8, 1)
    assert jnp.allclose(out, ref, atol=1e-5, rtol=1e-5), (out, ref)

    # --- multi-tile + partial-tile check (B not a multiple of TB) ---
    kx2, ka2 = jax.random.split(jax.random.PRNGKey(1), 2)
    B2 = 300
    x2 = jax.random.normal(kx2, (B2, state_size), jnp.float32)
    a2 = jax.random.normal(ka2, (B2, action_size), jnp.float32)
    out2 = critic_forward(x2, a2, packed, b3,
                          state_size=state_size, action_size=action_size,
                          h1=h1, h2=h2, block_b=128)   # 3 tiles, 84 padded rows
    jax.block_until_ready(out2)
    ref2 = critic_ref(x2, a2, params)
    assert out2.shape == (B2, 1)
    assert jnp.allclose(out2, ref2, atol=1e-5, rtol=1e-5), (out2, ref2)

    print("KERNEL_OK")
</pallas_src>

<mosaic_0001>
module attributes {stable_mosaic.version = 11 : i64} {
  func.func @kernel(%arg0: i32, %arg1: memref<80x128xf32, #tpu.memory_space<vmem>>, %arg2: memref<1xf32, #tpu.memory_space<smem>>, %arg3: memref<8x18xf32, #tpu.memory_space<vmem>>, %arg4: memref<1x8xf32, #tpu.memory_space<vmem>>) attributes {dimension_semantics = [#tpu.dimension_semantics<parallel>], iteration_bounds = array<i64: 1>, scalar_prefetch = 0 : i64, scratch_operands = 0 : i64, tpu.core_type = #tpu.core_type<tc>, window_params = [{pipeline_mode = #tpu.pipeline_mode<synchronous>, transform_indices = @transform_0, window_bounds = array<i64: 80, 128>}, {transform_indices = @transform_1, window_bounds = array<i64: 1>}, {transform_indices = @transform_2, window_bounds = array<i64: 8, 18>}, {transform_indices = @transform_3, window_bounds = array<i64: 1, 8>}]} {
    %c0 = arith.constant 0 : index
    %c0_0 = arith.constant 0 : index
    %0 = vector.load %arg3[%c0, %c0_0] : memref<8x18xf32, #tpu.memory_space<vmem>>, vector<8x18xf32>
    %c0_1 = arith.constant 0 : index
    %c0_2 = arith.constant 0 : index
    %1 = vector.load %arg1[%c0_1, %c0_2] : memref<80x128xf32, #tpu.memory_space<vmem>>, vector<18x8xf32>
    %c24 = arith.constant 24 : index
    %c0_3 = arith.constant 0 : index
    %2 = vector.load %arg1[%c24, %c0_3] : memref<80x128xf32, #tpu.memory_space<vmem>>, vector<1x8xf32>
    %c32 = arith.constant 32 : index
    %c0_4 = arith.constant 0 : index
    %3 = vector.load %arg1[%c32, %c0_4] : memref<80x128xf32, #tpu.memory_space<vmem>>, vector<8x16xf32>
    %c40 = arith.constant 40 : index
    %c0_5 = arith.constant 0 : index
    %4 = vector.load %arg1[%c40, %c0_5] : memref<80x128xf32, #tpu.memory_space<vmem>>, vector<18x16xf32>
    %c64 = arith.constant 64 : index
    %c0_6 = arith.constant 0 : index
    %5 = vector.load %arg1[%c64, %c0_6] : memref<80x128xf32, #tpu.memory_space<vmem>>, vector<1x16xf32>
    %c72 = arith.constant 72 : index
    %c0_7 = arith.constant 0 : index
    %6 = vector.load %arg1[%c72, %c0_7] : memref<80x128xf32, #tpu.memory_space<vmem>>, vector<1x16xf32>
    %cst = arith.constant dense<0.000000e+00> : vector<8x8xf32>
    %7 = tpu.matmul %0, %1, %cst {dimension_numbers = #tpu.dot_dimension_numbers<[1], [0], [0], [1], [0, 0, 1, 1], [], []>} : vector<8x18xf32>, vector<18x8xf32>, vector<8x8xf32> -> vector<8x8xf32>
    %8 = vector.broadcast %2 : vector<1x8xf32> to vector<8x8xf32>
    %9 = arith.addf %7, %8 : vector<8x8xf32>
    %cst_8 = arith.constant 0.000000e+00 : f32
    %10 = vector.broadcast %cst_8 : f32 to vector<8x8xf32>
    %11 = arith.maximumf %9, %10 : vector<8x8xf32>
    %cst_9 = arith.constant dense<0.000000e+00> : vector<8x16xf32>
    %12 = tpu.matmul %11, %3, %cst_9 {dimension_numbers = #tpu.dot_dimension_numbers<[1], [0], [0], [1], [0, 0, 1, 1], [], []>} : vector<8x8xf32>, vector<8x16xf32>, vector<8x16xf32> -> vector<8x16xf32>
    %cst_10 = arith.constant dense<0.000000e+00> : vector<8x16xf32>
    %13 = tpu.matmul %0, %4, %cst_10 {dimension_numbers = #tpu.dot_dimension_numbers<[1], [0], [0], [1], [0, 0, 1, 1], [], []>} : vector<8x18xf32>, vector<18x16xf32>, vector<8x16xf32> -> vector<8x16xf32>
    %14 = arith.addf %12, %13 : vector<8x16xf32>
    %15 = vector.broadcast %5 : vector<1x16xf32> to vector<8x16xf32>
    %16 = arith.addf %14, %15 : vector<8x16xf32>
    %cst_11 = arith.constant 0.000000e+00 : f32
    %17 = vector.broadcast %cst_11 : f32 to vector<8x16xf32>
    %18 = arith.maximumf %16, %17 : vector<8x16xf32>
    "tpu.trace_start"() <{level = 10 : i32, message = "ih,bh->ib"}> : () -> ()
    %cst_12 = arith.constant dense<0.000000e+00> : vector<1x8xf32>
    %19 = tpu.matmul %6, %18, %cst_12 {dimension_numbers = #tpu.dot_dimension_numbers<[1], [1], [0], [0], [0, 0, 1, 0], [], []>} : vector<1x16xf32>, vector<8x16xf32>, vector<1x8xf32> -> vector<1x8xf32>
    "tpu.trace_stop"() : () -> ()
    %c0_13 = arith.constant 0 : index
    %20 = memref.load %arg2[%c0_13] : memref<1xf32, #tpu.memory_space<smem>>
    %21 = vector.broadcast %20 : f32 to vector<1x8xf32>
    %22 = arith.addf %19, %21 : vector<1x8xf32>
    %c0_14 = arith.constant 0 : index
    %c0_15 = arith.constant 0 : index
    %23 = vector.load %arg4[%c0_14, %c0_15] : memref<1x8xf32, #tpu.memory_space<vmem>>, vector<1x8xf32>
    tpu.vector_store %arg4[%c0_14, %c0_15], %22 {strides = array<i32>} : memref<1x8xf32, #tpu.memory_space<vmem>>, vector<1x8xf32>,
    return
  }
  func.func @transform_0(%arg0: i32) -> (i32, i32) {
    %c0_i32 = arith.constant 0 : i32
    %c0_i32_0 = arith.constant 0 : i32
    %c0_i32_1 = arith.constant 0 : i32
    return %c0_i32, %c0_i32_0 : i32, i32
  }
  func.func @transform_1(%arg0: i32) -> i32 {
    %c0_i32 = arith.constant 0 : i32
    %c0_i32_0 = arith.constant 0 : i32
    return %c0_i32 : i32
  }
  func.func @transform_2(%arg0: i32) -> (i32, i32) {
    %c0_i32 = arith.constant 0 : i32
    %c0_i32_0 = arith.constant 0 : i32
    return %arg0, %c0_i32 : i32, i32
  }
  func.func @transform_3(%arg0: i32) -> (i32, i32) {
    %c0_i32 = arith.constant 0 : i32
    %c0_i32_0 = arith.constant 0 : i32
    return %arg0, %c0_i32 : i32, i32
  }
}

</mosaic_0001>

<llo_original>
// kernel: tpu_custom_call.1
$region0: #{tpu_custom_call.1}
  #allocation0 [shape = 'u32[]', space=smem, size = 0x4, offset = 0x4, fixed_abs, tag = 'smem constant byte address 0x4 - core index']
  #allocation1 [shape = 'u32[144,128]{1,0:T(1,128)}', space=vmem, size = 0x12000, scoped, tag = 'internal scratch']
  #allocation2 [shape = 'f32[1]{0:T(128)S(6)}', space=smem, size = 0x200, scoped, tag = 'scoped memory for tpu_custom_call.1']
  %s0 = inlined_call_operand.hbm [shape: f32[80,128], index: 0, kind: input, shape index: {}]
  %s1 = inlined_call_operand.<no memory space> [shape: f32[1], index: 1, kind: input, shape index: {}]
  %s2 = inlined_call_operand.hbm [shape: f32[8,18], index: 2, kind: input, shape index: {}]
  %s3 = inlined_call_operand.hbm [shape: f32[1,8], index: 3, kind: output, shape index: {}]
  %s4 = sld [smem:[#allocation0]]
  $region30: #{tpu_custom_call.1} parent=0
    _
  %s6 = ssub.s32 1, %s4
  %s7 = scalar_select 0, %s6, %s4
  %8 = sst [smem:[#allocation2]] %s1
  $region1: #{tpu_custom_call.1} parent=0
    #allocation3 [shape = 'u8[40960]{0}', space=vmem, size = 0xa000, scoped, tag = 'input window, operand 0, single buffered']
    #allocation4 [shape = 's32[1]{0}', space=sflag, size = 0x4, scoped, tag = 'scoped memory for tpu_custom_call.1']
    #allocation5 [shape = 's32[1]{0}', space=sflag, size = 0x4, scoped, tag = 'scoped memory for tpu_custom_call.1']
    #allocation6 [shape = 'u8[4096]{0}', space=vmem, size = 0x1000, scoped, tag = 'input window, operand 2, single buffered']
    #allocation7 [shape = 's32[1]{0}', space=sflag, size = 0x4, scoped, tag = 'scoped memory for tpu_custom_call.1']
    #allocation8 [shape = 'u8[512]{0}', space=vmem, size = 0x400, scoped, tag = 'output window, operand 0, single buffered']
    %9 = vsyncpa [#allocation4], 0
    %10 = vsyncpa [#allocation7], 0
    %11 = vsyncpa [#allocation5], 0
    // Predicated region
    $region2: #{tpu_custom_call.1} parent=1 // pred_check
      _
    $region3: #{tpu_custom_call.1} parent=1 // pred_check_branch
      %13 = sbr.rel (0) target = $region5
    $region4: #{tpu_custom_call.1} parent=1 // pred_region
      %s15 = ssub.s32 1280, 1280
      %16 = vsyncadd [#allocation4], %s15
      %s17 = sshll.u32 [#allocation3], 4
      %s18 = int_to_ptr.vmem [resolvable:$true] %s17
      %23 = dma.hbm_to_vmem [thread:$0]  %s0, 1280, %s18, [#allocation4], 128, 128, 8
    $region5: #{tpu_custom_call.1} parent=1 // pred_fallthru
      _
    // Predicated region
    $region6: #{tpu_custom_call.1} parent=1 // pred_check
      _
    $region7: #{tpu_custom_call.1} parent=1 // pred_check_branch
      %25 = sbr.rel (0) target = $region9
    $region8: #{tpu_custom_call.1} parent=1 // pred_region
      _
    $region9: #{tpu_custom_call.1} parent=1 // pred_fallthru
      _
    // Predicated region
    $region10: #{tpu_custom_call.1} parent=1 // pred_check
      _
    $region11: #{tpu_custom_call.1} parent=1 // pred_check_branch
      %27 = sbr.rel (0) target = $region13
    $region12: #{tpu_custom_call.1} parent=1 // pred_region
      %s29 = ssub.s32 128, 128
      %30 = vsyncadd [#allocation7], %s29
      %s32 = sshll.u32 [#allocation6], 4
      %s33 = int_to_ptr.vmem [resolvable:$true] %s32
      %35 = dma.hbm_to_vmem [thread:$0]  %s2, 128, %s33, [#allocation7]
    $region13: #{tpu_custom_call.1} parent=1 // pred_fallthru
      _
    // Predicated region
    $region14: #{tpu_custom_call.1} parent=1 // pred_check
      _
    $region15: #{tpu_custom_call.1} parent=1 // pred_check_branch
      %37 = sbr.rel (0) target = $region17
    $region16: #{tpu_custom_call.1} parent=1 // pred_region
      %38 = dma.done [#allocation4], 1280
    $region17: #{tpu_custom_call.1} parent=1 // pred_fallthru
      _
    // Predicated region
    $region18: #{tpu_custom_call.1} parent=1 // pred_check
      _
    $region19: #{tpu_custom_call.1} parent=1 // pred_check_branch
      %40 = sbr.rel (0) target = $region21
    $region20: #{tpu_custom_call.1} parent=1 // pred_region
      %41 = dma.done [#allocation7], 128
    $region21: #{tpu_custom_call.1} parent=1 // pred_fallthru
      _
    %v42 = vld [vmem:[#allocation6] sm:$0xff]
    %v43 = vld [vmem:[#allocation3] sm:$0xff]
    %v44 = vld [vmem:[#allocation3 + $0x8] sm:$0xff]
    %v45 = vld [vmem:[#allocation3 + $0x10] sm:$0x3]
    %v46 = vld [vmem:[#allocation3 + $0x18] sm:$0x1]
    %v47 = vld [vmem:[#allocation3 + $0x20] sm:$0xff]
    %v48 = vld [vmem:[#allocation3 + $0x28] sm:$0xff]
    %v49 = vld [vmem:[#allocation3 + $0x30] sm:$0xff]
    %v50 = vld [vmem:[#allocation3 + $0x38] sm:$0x3]
    %v51 = vld [vmem:[#allocation3 + $0x40] sm:$0x1]
    %v52 = vld [vmem:[#allocation3 + $0x48] sm:$0x1]
    %v53 = vlaneseq
    %v54 = vshrl.u32 %v53, 7
    %v55 = vsub.s32 0, %v54
    %v56 = vrot.slane %v46, %v55
    %vm57 = vcmask 146432
    %v59 = vsel %vm57, %v42, 0
    %vm61 = vcmask 1041408
    %v63 = vsel %vm61, %v45, 0
    %65 = vmatprep.subr.mxu0 0.0
    %66 = vmatpush1.msra.mxu0 0.0
    %67 = vmatprep.subr.mxu0 0.0
    %68 = vmatpush1.msra.mxu0 0.0
    %69 = vmatprep.subr.mxu0 0.0
    %70 = vmatpush1.msra.mxu0 0.0
    %71 = vmatprep.subr.mxu0 0.0
    %72 = vmatpush1.msra.mxu0 0.0
    %73 = vmatprep.subr.mxu0 0.0
    %74 = vmatpush1.msra.mxu0 0.0
    %75 = vmatprep.subr.mxu0 0.0
    %76 = vmatpush1.msra.mxu0 0.0
    %77 = vmatprep.subr.mxu0 0.0
    %78 = vmatpush1.msra.mxu0 0.0
    %79 = vmatprep.subr.mxu0 0.0
    %80 = vmatpush1.msra.mxu0 0.0
    %81 = vmatprep.subr.mxu0 0.0
    %82 = vmatpush1.msra.mxu0 0.0
    %83 = vmatprep.subr.mxu0 0.0
    %84 = vmatpush1.msra.mxu0 0.0
    %85 = vmatprep.subr.mxu0 0.0
    %86 = vmatpush1.msra.mxu0 0.0
    %87 = vmatprep.subr.mxu0 0.0
    %88 = vmatpush1.msra.mxu0 0.0
    %89 = vmatprep.subr.mxu0 0.0
    %90 = vmatpush1.msra.mxu0 0.0
    %91 = vmatprep.subr.mxu0 0.0
    %92 = vmatpush1.msra.mxu0 %v63
    %93 = vmatprep.subr.mxu0 0.0
    %94 = vmatpush1.msra.mxu0 %v44
    %95 = vmatprep.subr.mxu0 0.0
    %96 = vmatpush1.msra.mxu0 %v43
    %97 = vmatprep.subr.mxu0 0.0
    %98 = vmatpush2.msra.mxu0 0.0
    %99 = vmatprep.subr.mxu0 0.0
    %100 = vmatpush2.msra.mxu0 0.0
    %101 = vmatprep.subr.mxu0 0.0
    %102 = vmatpush2.msra.mxu0 0.0
    %103 = vmatprep.subr.mxu0 0.0
    %104 = vmatpush2.msra.mxu0 0.0
    %105 = vmatprep.subr.mxu0 0.0
    %106 = vmatpush2.msra.mxu0 0.0
    %107 = vmatprep.subr.mxu0 0.0
    %108 = vmatpush2.msra.mxu0 0.0
    %109 = vmatprep.subr.mxu0 0.0
    %110 = vmatpush2.msra.mxu0 0.0
    %111 = vmatprep.subr.mxu0 0.0
    %112 = vmatpush2.msra.mxu0 0.0
    %113 = vmatprep.subr.mxu0 0.0
    %114 = vmatpush2.msra.mxu0 0.0
    %115 = vmatprep.subr.mxu0 0.0
    %116 = vmatpush2.msra.mxu0 0.0
    %117 = vmatprep.subr.mxu0 0.0
    %118 = vmatpush2.msra.mxu0 0.0
    %119 = vmatprep.subr.mxu0 0.0
    %120 = vmatpush2.msra.mxu0 0.0
    %121 = vmatprep.subr.mxu0 0.0
    %122 = vmatpush2.msra.mxu0 0.0
    %123 = vmatprep.subr.mxu0 0.0
    %124 = vmatpush2.msra.mxu0 0.0
    %125 = vmatprep.subr.mxu0 0.0
    %126 = vmatpush2.msra.mxu0 0.0
    %127 = vmatprep.subr.mxu0 0.0
    %128 = vmatpush2.msra.mxu0 0.0
    %129 = vmatprep.mubr.f32.mxu0 0.0
    %130 = vmatmul.mubr.f32.gmra.mxu0 %v59
    %v131 = vpop.f32.mrf.mxu0
    %v132 = vadd.f32 %v56, %v131
    %v133 = vpop.f32.mrf.mxu0
    %134 = vdwg.mxu0
    %v135 = vmax.f32 %v132, 0.0
    %v137 = vsel %vm61, %v50, 0
    %139 = vmatprep.subr.mxu0 0.0
    %140 = vmatpush1.msra.mxu0 0.0
    %141 = vmatprep.subr.mxu0 0.0
    %142 = vmatpush1.msra.mxu0 0.0
    %143 = vmatprep.subr.mxu0 0.0
    %144 = vmatpush1.msra.mxu0 0.0
    %145 = vmatprep.subr.mxu0 0.0
    %146 = vmatpush1.msra.mxu0 0.0
    %147 = vmatprep.subr.mxu0 0.0
    %148 = vmatpush1.msra.mxu0 0.0
    %149 = vmatprep.subr.mxu0 0.0
    %150 = vmatpush1.msra.mxu0 0.0
    %151 = vmatprep.subr.mxu0 0.0
    %152 = vmatpush1.msra.mxu0 0.0
    %153 = vmatprep.subr.mxu0 0.0
    %154 = vmatpush1.msra.mxu0 0.0
    %155 = vmatprep.subr.mxu0 0.0
    %156 = vmatpush1.msra.mxu0 0.0
    %157 = vmatprep.subr.mxu0 0.0
    %158 = vmatpush1.msra.mxu0 0.0
    %159 = vmatprep.subr.mxu0 0.0
    %160 = vmatpush1.msra.mxu0 0.0
    %161 = vmatprep.subr.mxu0 0.0
    %162 = vmatpush1.msra.mxu0 0.0
    %163 = vmatprep.subr.mxu0 0.0
    %164 = vmatpush1.msra.mxu0 0.0
    %165 = vmatprep.subr.mxu0 0.0
    %166 = vmatpush1.msra.mxu0 %v137
    %167 = vmatprep.subr.mxu0 0.0
    %168 = vmatpush1.msra.mxu0 %v49
    %169 = vmatprep.subr.mxu0 0.0
    %170 = vmatpush1.msra.mxu0 %v48
    %171 = vmatprep.subr.mxu0 0.0
    %172 = vmatpush2.msra.mxu0 0.0
    %173 = vmatprep.subr.mxu0 0.0
    %174 = vmatpush2.msra.mxu0 0.0
    %175 = vmatprep.subr.mxu0 0.0
    %176 = vmatpush2.msra.mxu0 0.0
    %177 = vmatprep.subr.mxu0 0.0
    %178 = vmatpush2.msra.mxu0 0.0
    %179 = vmatprep.subr.mxu0 0.0
    %180 = vmatpush2.msra.mxu0 0.0
    %181 = vmatprep.subr.mxu0 0.0
    %182 = vmatpush2.msra.mxu0 0.0
    %183 = vmatprep.subr.mxu0 0.0
    %184 = vmatpush2.msra.mxu0 0.0
    %185 = vmatprep.subr.mxu0 0.0
    %186 = vmatpush2.msra.mxu0 0.0
    %187 = vmatprep.subr.mxu0 0.0
    %188 = vmatpush2.msra.mxu0 0.0
    %189 = vmatprep.subr.mxu0 0.0
    %190 = vmatpush2.msra.mxu0 0.0
    %191 = vmatprep.subr.mxu0 0.0
    %192 = vmatpush2.msra.mxu0 0.0
    %193 = vmatprep.subr.mxu0 0.0
    %194 = vmatpush2.msra.mxu0 0.0
    %195 = vmatprep.subr.mxu0 0.0
    %196 = vmatpush2.msra.mxu0 0.0
    %197 = vmatprep.subr.mxu0 0.0
    %198 = vmatpush2.msra.mxu0 0.0
    %199 = vmatprep.subr.mxu0 0.0
    %200 = vmatpush2.msra.mxu0 0.0
    %201 = vmatprep.subr.mxu0 0.0
    %202 = vmatpush2.msra.mxu0 0.0
    %203 = vmatprep.mubr.f32.mxu0 0.0
    %204 = vmatmul.mubr.f32.gmra.mxu0 %v59
    %v205 = vpop.f32.mrf.mxu0
    %v206 = vadd.f32 0.0, %v205
    %v207 = vpop.f32.mrf.mxu0
    %208 = vdwg.mxu0
    %vm209 = vcmask 64512
    %v211 = vsel %vm209, %v135, 0
    %213 = vmatprep.subr.mxu0 0.0
    %214 = vmatpush1.msra.mxu0 0.0
    %215 = vmatprep.subr.mxu0 0.0
    %216 = vmatpush1.msra.mxu0 0.0
    %217 = vmatprep.subr.mxu0 0.0
    %218 = vmatpush1.msra.mxu0 0.0
    %219 = vmatprep.subr.mxu0 0.0
    %220 = vmatpush1.msra.mxu0 0.0
    %221 = vmatprep.subr.mxu0 0.0
    %222 = vmatpush1.msra.mxu0 0.0
    %223 = vmatprep.subr.mxu0 0.0
    %224 = vmatpush1.msra.mxu0 0.0
    %225 = vmatprep.subr.mxu0 0.0
    %226 = vmatpush1.msra.mxu0 0.0
    %227 = vmatprep.subr.mxu0 0.0
    %228 = vmatpush1.msra.mxu0 0.0
    %229 = vmatprep.subr.mxu0 0.0
    %230 = vmatpush1.msra.mxu0 0.0
    %231 = vmatprep.subr.mxu0 0.0
    %232 = vmatpush1.msra.mxu0 0.0
    %233 = vmatprep.subr.mxu0 0.0
    %234 = vmatpush1.msra.mxu0 0.0
    %235 = vmatprep.subr.mxu0 0.0
    %236 = vmatpush1.msra.mxu0 0.0
    %237 = vmatprep.subr.mxu0 0.0
    %238 = vmatpush1.msra.mxu0 0.0
    %239 = vmatprep.subr.mxu0 0.0
    %240 = vmatpush1.msra.mxu0 0.0
    %241 = vmatprep.subr.mxu0 0.0
    %242 = vmatpush1.msra.mxu0 0.0
    %243 = vmatprep.subr.mxu0 0.0
    %244 = vmatpush1.msra.mxu0 %v47
    %245 = vmatprep.subr.mxu0 0.0
    %246 = vmatpush2.msra.mxu0 0.0
    %247 = vmatprep.subr.mxu0 0.0
    %248 = vmatpush2.msra.mxu0 0.0
    %249 = vmatprep.subr.mxu0 0.0
    %250 = vmatpush2.msra.mxu0 0.0
    %251 = vmatprep.subr.mxu0 0.0
    %252 = vmatpush2.msra.mxu0 0.0
    %253 = vmatprep.subr.mxu0 0.0
    %254 = vmatpush2.msra.mxu0 0.0
    %255 = vmatprep.subr.mxu0 0.0
    %256 = vmatpush2.msra.mxu0 0.0
    %257 = vmatprep.subr.mxu0 0.0
    %258 = vmatpush2.msra.mxu0 0.0
    %259 = vmatprep.subr.mxu0 0.0
    %260 = vmatpush2.msra.mxu0 0.0
    %261 = vmatprep.subr.mxu0 0.0
    %262 = vmatpush2.msra.mxu0 0.0
    %263 = vmatprep.subr.mxu0 0.0
    %264 = vmatpush2.msra.mxu0 0.0
    %265 = vmatprep.subr.mxu0 0.0
    %266 = vmatpush2.msra.mxu0 0.0
    %267 = vmatprep.subr.mxu0 0.0
    %268 = vmatpush2.msra.mxu0 0.0
    %269 = vmatprep.subr.mxu0 0.0
    %270 = vmatpush2.msra.mxu0 0.0
    %271 = vmatprep.subr.mxu0 0.0
    %272 = vmatpush2.msra.mxu0 0.0
    %273 = vmatprep.subr.mxu0 0.0
    %274 = vmatpush2.msra.mxu0 0.0
    %275 = vmatprep.subr.mxu0 0.0
    %276 = vmatpush2.msra.mxu0 0.0
    %277 = vmatprep.mubr.f32.mxu0 0.0
    %278 = vmatmul.mubr.f32.gmra.mxu0 %v211
    %v279 = vpop.f32.mrf.mxu0
    %v280 = vadd.f32 %v206, %v279
    %v281 = vpop.f32.mrf.mxu0
    %282 = vdwg.mxu0
    %v283 = vlaneseq
    %v284 = vshrl.u32 %v283, 7
    %v285 = vsub.s32 0, %v284
    %v286 = vrot.slane %v51, %v285
    %v287 = vadd.f32 %v280, %v286
    %v288 = vmax.f32 %v287, 0.0
    %s289 = sld [smem:[#allocation2]]
    %v290 = vstv %s289
    %vm291 = vcmask 130048
    %v293 = vsel %vm291, %v52, 0
    %v296 = vsel %vm291, %v288, 0
    %298 = vmatprep.subr.mxu0 0.0
    %299 = vmatpush1.xpose.msra.mxu0 0.0
    %300 = vmatprep.subr.mxu0 0.0
    %301 = vmatpush1.xpose.msra.mxu0 0.0
    %302 = vmatprep.subr.mxu0 0.0
    %303 = vmatpush1.xpose.msra.mxu0 0.0
    %304 = vmatprep.subr.mxu0 0.0
    %305 = vmatpush1.xpose.msra.mxu0 0.0
    %306 = vmatprep.subr.mxu0 0.0
    %307 = vmatpush1.xpose.msra.mxu0 0.0
    %308 = vmatprep.subr.mxu0 0.0
    %309 = vmatpush1.xpose.msra.mxu0 0.0
    %310 = vmatprep.subr.mxu0 0.0
    %311 = vmatpush1.xpose.msra.mxu0 0.0
    %312 = vmatprep.subr.mxu0 0.0
    %313 = vmatpush1.xpose.msra.mxu0 0.0
    %314 = vmatprep.subr.mxu0 0.0
    %315 = vmatpush1.xpose.msra.mxu0 0.0
    %316 = vmatprep.subr.mxu0 0.0
    %317 = vmatpush1.xpose.msra.mxu0 0.0
    %318 = vmatprep.subr.mxu0 0.0
    %319 = vmatpush1.xpose.msra.mxu0 0.0
    %320 = vmatprep.subr.mxu0 0.0
    %321 = vmatpush1.xpose.msra.mxu0 0.0
    %322 = vmatprep.subr.mxu0 0.0
    %323 = vmatpush1.xpose.msra.mxu0 0.0
    %324 = vmatprep.subr.mxu0 0.0
    %325 = vmatpush1.xpose.msra.mxu0 0.0
    %326 = vmatprep.subr.mxu0 0.0
    %327 = vmatpush1.xpose.msra.mxu0 0.0
    %328 = vmatprep.subr.mxu0 0.0
    %329 = vmatpush1.xpose.msra.mxu0 %v296
    %330 = vmatprep.subr.mxu0 0.0
    %331 = vmatpush2.xpose.msra.mxu0 0.0
    %332 = vmatprep.subr.mxu0 0.0
    %333 = vmatpush2.xpose.msra.mxu0 0.0
    %334 = vmatprep.subr.mxu0 0.0
    %335 = vmatpush2.xpose.msra.mxu0 0.0
    %336 = vmatprep.subr.mxu0 0.0
    %337 = vmatpush2.xpose.msra.mxu0 0.0
    %338 = vmatprep.subr.mxu0 0.0
    %339 = vmatpush2.xpose.msra.mxu0 0.0
    %340 = vmatprep.subr.mxu0 0.0
    %341 = vmatpush2.xpose.msra.mxu0 0.0
    %342 = vmatprep.subr.mxu0 0.0
    %343 = vmatpush2.xpose.msra.mxu0 0.0
    %344 = vmatprep.subr.mxu0 0.0
    %345 = vmatpush2.xpose.msra.mxu0 0.0
    %346 = vmatprep.subr.mxu0 0.0
    %347 = vmatpush2.xpose.msra.mxu0 0.0
    %348 = vmatprep.subr.mxu0 0.0
    %349 = vmatpush2.xpose.msra.mxu0 0.0
    %350 = vmatprep.subr.mxu0 0.0
    %351 = vmatpush2.xpose.msra.mxu0 0.0
    %352 = vmatprep.subr.mxu0 0.0
    %353 = vmatpush2.xpose.msra.mxu0 0.0
    %354 = vmatprep.subr.mxu0 0.0
    %355 = vmatpush2.xpose.msra.mxu0 0.0
    %356 = vmatprep.subr.mxu0 0.0
    %357 = vmatpush2.xpose.msra.mxu0 0.0
    %358 = vmatprep.subr.mxu0 0.0
    %359 = vmatpush2.xpose.msra.mxu0 0.0
    %360 = vmatprep.subr.mxu0 0.0
    %361 = vmatpush2.xpose.msra.mxu0 0.0
    %362 = vmatprep.mubr.f32.mxu0 0.0
    %363 = vmatmul.mubr.f32.gmra.mxu0 %v293
    %v364 = vpop.f32.mrf.mxu0
    %v365 = vadd.f32 %v290, %v364
    %v366 = vpop.f32.mrf.mxu0
    %367 = vdwg.mxu0
    %vm368 = vcmask 57344
    %369 = vst.msk [vmem:[#allocation8] sm:$0x1] %vm368, %v365
    // Predicated region
    $region22: #{tpu_custom_call.1} parent=1 // pred_check
      _
    $region23: #{tpu_custom_call.1} parent=1 // pred_check_branch
      %371 = sbr.rel (0) target = $region25
    $region24: #{tpu_custom_call.1} parent=1 // pred_region
      %s373 = ssub.s32 16, 16
      %374 = vsyncadd [#allocation5], %s373
      %s376 = sshll.u32 [#allocation8], 4
      %s377 = int_to_ptr.vmem [resolvable:$true] %s376
      %379 = dma.vmem_to_hbm [thread:$0]  %s377, 16, %s3, [#allocation5]
    $region25: #{tpu_custom_call.1} parent=1 // pred_fallthru
      _
    // Predicated region
    $region26: #{tpu_custom_call.1} parent=1 // pred_check
      _
    $region27: #{tpu_custom_call.1} parent=1 // pred_check_branch
      %381 = sbr.rel (0) target = $region29
    $region28: #{tpu_custom_call.1} parent=1 // pred_region
      %382 = dma.done [#allocation5], 16
    $region29: #{tpu_custom_call.1} parent=1 // pred_fallthru
      _
    %383 = vsyncpa [#allocation4], 1
    %384 = vsyncpa [#allocation7], 1
    %385 = vsyncpa [#allocation5], 1

</llo_original>
